<compile_context>
chip_gen: v7x
topology: tpu7x:2x2x1
jax: 0.10.0
libtpu: 0.0.40
codegen_flags: <defaults>
</compile_context>

<pallas_src>
import math

import jax
import jax.numpy as jnp
from jax.experimental import pallas as pl
from jax.experimental.pallas import tpu as pltpu


def _round_up(x, m):
    return ((x + m - 1) // m) * m


def _vmem_budget_bytes():
    # Generation-aware VMEM budget: claim ~75% of physical capacity, leaving
    # headroom for pipeline double-buffers and compiler-internal scratch
    # (v7x has only 64 MiB per TensorCore; v5e/v6e have 128 MiB).
    try:
        cap = pltpu.get_tpu_info().vmem_capacity_bytes
    except Exception:
        cap = 64 * 1024 * 1024  # conservative (v7x-class) fallback
    return int(cap) * 3 // 4


# --------------------------- support = X @ W ---------------------------------

def _support_kernel(x_ref, w_ref, out_ref, acc_ref):
    k = pl.program_id(1)

    @pl.when(k == 0)
    def _():
        acc_ref[...] = jnp.zeros_like(acc_ref)

    acc_ref[...] += jnp.dot(
        x_ref[...], w_ref[...], preferred_element_type=jnp.float32
    )

    @pl.when(k == pl.num_programs(1) - 1)
    def _():
        out_ref[...] = acc_ref[...].astype(out_ref.dtype)


# ----------------------- output = adj @ support (+b) -------------------------

def _make_aggregate_kernel(tk, sup_resident, has_bias, use_scratch):
    """Builds the adj @ support kernel for the chosen schedule."""

    def kernel(*refs):
        if has_bias:
            adj_ref, sup_ref, b_ref, out_ref = refs[0], refs[1], refs[2], refs[3]
            scratch = refs[4:]
        else:
            adj_ref, sup_ref, out_ref = refs[0], refs[1], refs[2]
            b_ref = None
            scratch = refs[3:]
        # Accumulate directly into the resident f32 output block when possible.
        acc_ref = scratch[0] if use_scratch else out_ref

        k = pl.program_id(1)

        @pl.when(k == 0)
        def _():
            acc_ref[...] = jnp.zeros_like(acc_ref)

        if sup_resident:
            # Whole support lives in VMEM; slice the k-th stripe (aligned).
            start = pl.multiple_of(k * tk, 128)
            sup = sup_ref[pl.ds(start, tk), :]
        else:
            sup = sup_ref[...]

        acc_ref[...] += jnp.dot(
            adj_ref[...], sup, preferred_element_type=jnp.float32
        )

        if has_bias or use_scratch:
            @pl.when(k == pl.num_programs(1) - 1)
            def _():
                res = acc_ref[...]
                if has_bias:
                    res = res + b_ref[...]  # bias added once, at finalize
                out_ref[...] = res.astype(out_ref.dtype)

    return kernel


# ------------------------------ tile selection --------------------------------

def _select_aggregate_tiles(n128, f_out_p, mxu_bytes, out_bytes, use_scratch,
                            budget):
    # Contraction (lane) tile: as wide as possible for long contiguous adj DMA
    # rows, without inflating N by more than ~12.5% of padding.
    tk = 128
    for cand in (2048, 1024, 512, 256, 128):
        if cand >= n128:
            tk = n128
            break
        if _round_up(n128, cand) - n128 <= n128 // 8:
            tk = cand
            break
    n_p = _round_up(n128, tk)

    # Row tile: <= 1024, must divide n_p, and leave >= 2 row iterations so both
    # TensorCores get work on dual-core chips (harmless extra steps elsewhere).
    tm = 128
    for cand in (1024, 512, 256, 128):
        if n_p % cand:
            continue
        if n_p >= 256 and n_p // cand < 2:
            continue
        tm = cand
        break

    def smaller_divisor(cur):
        for cand in (1024, 512, 256, 128):
            if cand < cur and n_p % cand == 0:
                return cand
        return 128

    def usage(tm_, tk_, resident_):
        sup = 2 * (n_p if resident_ else tk_) * f_out_p * mxu_bytes
        return (2 * tm_ * tk_ * mxu_bytes            # adj double-buffer
                + sup                                 # support buffers
                + 2 * tm_ * f_out_p * out_bytes       # output buffers
                + (tm_ * f_out_p * 4 if use_scratch else 0))

    # Keep the whole support resident when it is comfortably small.
    resident = n_p * f_out_p * mxu_bytes <= 8 * 1024 * 1024
    while usage(tm, tk, resident) > budget:
        if resident:
            resident = False
        elif tk > 128:
            tk = smaller_divisor(tk)
        elif tm > 128:
            tm = smaller_divisor(tm)
        else:
            break
    return n_p, tm, tk, resident


def _select_support_tiles(n_p, f_in_p):
    sup_tm = 128
    for cand in (512, 256, 128):
        if n_p % cand == 0:
            sup_tm = cand
            break
    if f_in_p <= 1024:
        tk_in = f_in_p
    else:
        tk_in = 128
        for cand in (1024, 512, 256, 128):
            if f_in_p % cand == 0:
                tk_in = cand
                break
    return sup_tm, tk_in


# -------------------------------- wrapper ------------------------------------

def graph_convolution(x, adj, weight, bias=None, *,
                      compute_dtype=None,       # jnp.bfloat16 recommended on v6e/v7x
                      vmem_limit_bytes=None):
    """Pallas GCN layer: adj @ (x @ weight) [+ bias].

    x:      (N, F_in)     float32
    adj:    (N, N)        float32 dense (stands in for torch.spmm's sparse adj)
    weight: (F_in, F_out) float32
    bias:   (F_out,) or None
    """
    N, f_in = x.shape
    f_out = weight.shape[1]
    out_dtype = jnp.dtype(x.dtype)
    mxu_dtype = jnp.dtype(compute_dtype) if compute_dtype is not None else out_dtype
    mxu_bytes = mxu_dtype.itemsize
    out_bytes = out_dtype.itemsize

    if vmem_limit_bytes is None:
        vmem_limit_bytes = _vmem_budget_bytes()

    # Lane-dense feature dims (last dim multiple of 128 -> unmasked vst,
    # full MXU result columns).
    f_in_p = _round_up(f_in, 128)
    f_out_p = _round_up(f_out, 128)
    n128 = _round_up(N, 128)

    # Accumulate directly into the resident output block when it's already f32.
    use_scratch = out_dtype != jnp.dtype(jnp.float32)

    n_p, tm, tk, sup_resident = _select_aggregate_tiles(
        n128, f_out_p, mxu_bytes, out_bytes, use_scratch, vmem_limit_bytes)

    # Zero padding is semantically neutral: padded adj rows/cols and padded
    # x rows/features contribute zeros; the result is sliced back at the end.
    # TODO(synk): for multi-layer GCNs / training epochs, pre-pad & pre-cast adj
    # once outside this wrapper and reuse it, amortizing the pad+cast pass.
    x_p = jnp.pad(x, ((0, n_p - N), (0, f_in_p - f_in))).astype(mxu_dtype)
    adj_p = jnp.pad(adj, ((0, n_p - N), (0, n_p - N))).astype(mxu_dtype)
    w_p = jnp.pad(weight, ((0, f_in_p - f_in), (0, f_out_p - f_out))).astype(mxu_dtype)

    # ---------------- support = X @ W (rows x f_in tiled) --------------------
    sup_tm, tk_in = _select_support_tiles(n_p, f_in_p)
    support = pl.pallas_call(
        _support_kernel,
        out_shape=jax.ShapeDtypeStruct((n_p, f_out_p), mxu_dtype),
        grid_spec=pltpu.PrefetchScalarGridSpec(
            num_scalar_prefetch=0,
            grid=(n_p // sup_tm, f_in_p // tk_in),
            in_specs=[
                pl.BlockSpec((sup_tm, tk_in), lambda i, k: (i, k)),
                pl.BlockSpec((tk_in, f_out_p), lambda i, k: (k, 0)),
            ],
            out_specs=pl.BlockSpec((sup_tm, f_out_p), lambda i, k: (i, 0)),
            scratch_shapes=[pltpu.VMEM((sup_tm, f_out_p), jnp.float32)],
        ),
        compiler_params=pltpu.CompilerParams(
            dimension_semantics=("parallel", "arbitrary"),
            vmem_limit_bytes=vmem_limit_bytes,
        ),
        cost_estimate=pl.CostEstimate(
            flops=2 * n_p * f_in_p * f_out_p,
            transcendentals=0,
            bytes_accessed=mxu_bytes * (n_p * f_in_p
                                        + (n_p // sup_tm) * f_in_p * f_out_p
                                        + n_p * f_out_p),
        ),
    )(x_p, w_p)

    # ---------------- output = adj @ support (+ bias) -------------------------
    grid = (n_p // tm, n_p // tk)
    adj_spec = pl.BlockSpec((tm, tk), lambda i, k: (i, k))
    if sup_resident:
        # Constant block index -> the whole support array is DMA'd once and
        # stays resident in VMEM for every grid step.
        sup_spec = pl.BlockSpec((n_p, f_out_p), lambda i, k: (0, 0))
        sup_stream_bytes = n_p * f_out_p * mxu_bytes
    else:
        sup_spec = pl.BlockSpec((tk, f_out_p), lambda i, k: (k, 0))
        sup_stream_bytes = (n_p // tm) * n_p * f_out_p * mxu_bytes
    out_spec = pl.BlockSpec((tm, f_out_p), lambda i, k: (i, 0))
    scratch = [pltpu.VMEM((tm, f_out_p), jnp.float32)] if use_scratch else []

    has_bias = bias is not None
    in_specs = [adj_spec, sup_spec]
    args = [adj_p, support]
    if has_bias:
        # bias kept in f32 so the finalize add happens in the f32 accumulator.
        b_p = jnp.pad(bias.astype(jnp.float32).reshape(1, f_out),
                      ((0, 0), (0, f_out_p - f_out)))
        in_specs.append(pl.BlockSpec((1, f_out_p), lambda i, k: (0, 0)))
        args.append(b_p)

    kernel = _make_aggregate_kernel(tk, sup_resident, has_bias, use_scratch)

    out_p = pl.pallas_call(
        kernel,
        out_shape=jax.ShapeDtypeStruct((n_p, f_out_p), out_dtype),
        grid_spec=pltpu.PrefetchScalarGridSpec(
            num_scalar_prefetch=0,
            grid=grid,
            in_specs=in_specs,
            out_specs=out_spec,
            scratch_shapes=scratch,
        ),
        compiler_params=pltpu.CompilerParams(
            dimension_semantics=("parallel", "arbitrary"),
            vmem_limit_bytes=vmem_limit_bytes,
        ),
        cost_estimate=pl.CostEstimate(
            flops=2 * n_p * n_p * f_out_p,
            transcendentals=0,
            bytes_accessed=(mxu_bytes * n_p * n_p
                            + sup_stream_bytes
                            + out_bytes * n_p * f_out_p
                            + (4 * f_out_p if has_bias else 0)),
        ),
    )(*args)

    return out_p[:N, :f_out]


if __name__ == "__main__":
    # Small, module-consistent shapes: N nodes, in_features, out_features.
    N, F_IN, F_OUT = 64, 32, 16

    key = jax.random.PRNGKey(0)
    k_x, k_adj, k_w, k_b = jax.random.split(key, 4)

    x = jax.random.normal(k_x, (N, F_IN), dtype=jnp.float32)

    # Symmetric, row-normalized dense adjacency (stands in for the sparse adj).
    # TODO(synk): torch.spmm's sparse adjacency is realized as a dense MXU matmul.
    a_raw = (jax.random.uniform(k_adj, (N, N)) > 0.8).astype(jnp.float32)
    adj = a_raw + a_raw.T + jnp.eye(N, dtype=jnp.float32)
    adj = adj / jnp.sum(adj, axis=1, keepdims=True)

    # reset_parameters(): U(-stdv, stdv), stdv = 1 / sqrt(out_features).
    stdv = 1.0 / math.sqrt(F_OUT)
    weight = jax.random.uniform(k_w, (F_IN, F_OUT), minval=-stdv, maxval=stdv,
                                dtype=jnp.float32)
    bias = jax.random.uniform(k_b, (F_OUT,), minval=-stdv, maxval=stdv,
                              dtype=jnp.float32)

    ref = adj @ (x @ weight) + bias[None, :]
    ref_nb = adj @ (x @ weight)

    # f32 path with bias.
    out = jax.block_until_ready(graph_convolution(x, adj, weight, bias))
    assert out.shape == (N, F_OUT)
    assert jnp.allclose(out, ref, atol=1e-4, rtol=1e-4)

    # Bias-free path (register_parameter('bias', None) branch).
    out_nb = jax.block_until_ready(graph_convolution(x, adj, weight, None))
    assert jnp.allclose(out_nb, ref_nb, atol=1e-4, rtol=1e-4)

    # bf16 compute path (recommended on v6e/v7x): halves adj/support HBM
    # traffic, f32 accumulation kept; tolerance loosened for bf16 rounding.
    out_bf = jax.block_until_ready(
        graph_convolution(x, adj, weight, bias, compute_dtype=jnp.bfloat16))
    assert jnp.allclose(out_bf, ref, atol=3e-2, rtol=3e-2)

    print("KERNEL_OK")
</pallas_src>

<mosaic_0001>
module attributes {stable_mosaic.version = 11 : i64} {
  func.func @_support_kernel(%arg0: i32, %arg1: i32, %arg2: memref<128x128xf32, #tpu.memory_space<vmem>>, %arg3: memref<128x128xf32, #tpu.memory_space<vmem>>, %arg4: memref<128x128xf32, #tpu.memory_space<vmem>>, %arg5: memref<128x128xf32, #tpu.memory_space<vmem>>) attributes {dimension_semantics = [#tpu.dimension_semantics<parallel>, #tpu.dimension_semantics<arbitrary>], iteration_bounds = array<i64: 1, 1>, scalar_prefetch = 0 : i64, scratch_operands = 1 : i64, tpu.core_type = #tpu.core_type<tc>, window_params = [{transform_indices = @transform_0, window_bounds = array<i64: 128, 128>}, {transform_indices = @transform_1, window_bounds = array<i64: 128, 128>}, {transform_indices = @transform_2, window_bounds = array<i64: 128, 128>}]} {
    %c0_i32 = arith.constant 0 : i32
    %0 = arith.cmpi eq, %arg1, %c0_i32 : i32
    %1 = arith.extui %0 : i1 to i32
    %c0_i32_0 = arith.constant 0 : i32
    %2 = arith.cmpi ne, %1, %c0_i32_0 : i32
    scf.if %2 {
      %cst_10 = arith.constant 0.000000e+00 : f32
      %12 = vector.broadcast %cst_10 : f32 to vector<128x128xf32>
      %c0_11 = arith.constant 0 : index
      %c0_12 = arith.constant 0 : index
      %13 = vector.load %arg5[%c0_11, %c0_12] : memref<128x128xf32, #tpu.memory_space<vmem>>, vector<128x128xf32>
      tpu.vector_store %arg5[%c0_11, %c0_12], %12 {strides = array<i32>} : memref<128x128xf32, #tpu.memory_space<vmem>>, vector<128x128xf32>,
    } else {
    }
    %c0 = arith.constant 0 : index
    %c0_1 = arith.constant 0 : index
    %3 = vector.load %arg5[%c0, %c0_1] : memref<128x128xf32, #tpu.memory_space<vmem>>, vector<128x128xf32>
    %c0_2 = arith.constant 0 : index
    %c0_3 = arith.constant 0 : index
    %4 = vector.load %arg2[%c0_2, %c0_3] : memref<128x128xf32, #tpu.memory_space<vmem>>, vector<128x128xf32>
    %c0_4 = arith.constant 0 : index
    %c0_5 = arith.constant 0 : index
    %5 = vector.load %arg3[%c0_4, %c0_5] : memref<128x128xf32, #tpu.memory_space<vmem>>, vector<128x128xf32>
    %cst = arith.constant dense<0.000000e+00> : vector<128x128xf32>
    %6 = tpu.matmul %4, %5, %cst {dimension_numbers = #tpu.dot_dimension_numbers<[1], [0], [0], [1], [0, 0, 1, 1], [], []>} : vector<128x128xf32>, vector<128x128xf32>, vector<128x128xf32> -> vector<128x128xf32>
    %7 = arith.addf %3, %6 : vector<128x128xf32>
    %c0_6 = arith.constant 0 : index
    %c0_7 = arith.constant 0 : index
    %8 = vector.load %arg5[%c0_6, %c0_7] : memref<128x128xf32, #tpu.memory_space<vmem>>, vector<128x128xf32>
    tpu.vector_store %arg5[%c0_6, %c0_7], %7 {strides = array<i32>} : memref<128x128xf32, #tpu.memory_space<vmem>>, vector<128x128xf32>,
    %c0_i32_8 = arith.constant 0 : i32
    %9 = arith.cmpi eq, %arg1, %c0_i32_8 : i32
    %10 = arith.extui %9 : i1 to i32
    %c0_i32_9 = arith.constant 0 : i32
    %11 = arith.cmpi ne, %10, %c0_i32_9 : i32
    scf.if %11 {
      %c0_10 = arith.constant 0 : index
      %c0_11 = arith.constant 0 : index
      %12 = vector.load %arg5[%c0_10, %c0_11] : memref<128x128xf32, #tpu.memory_space<vmem>>, vector<128x128xf32>
      %c0_12 = arith.constant 0 : index
      %c0_13 = arith.constant 0 : index
      %13 = vector.load %arg4[%c0_12, %c0_13] : memref<128x128xf32, #tpu.memory_space<vmem>>, vector<128x128xf32>
      tpu.vector_store %arg4[%c0_12, %c0_13], %12 {strides = array<i32>} : memref<128x128xf32, #tpu.memory_space<vmem>>, vector<128x128xf32>,
    } else {
    }
    return
  }
  func.func @transform_0(%arg0: i32, %arg1: i32) -> (i32, i32) {
    %c0_i32 = arith.constant 0 : i32
    return %arg0, %arg1 : i32, i32
  }
  func.func @transform_1(%arg0: i32, %arg1: i32) -> (i32, i32) {
    %c0_i32 = arith.constant 0 : i32
    %c0_i32_0 = arith.constant 0 : i32
    return %arg1, %c0_i32 : i32, i32
  }
  func.func @transform_2(%arg0: i32, %arg1: i32) -> (i32, i32) {
    %c0_i32 = arith.constant 0 : i32
    %c0_i32_0 = arith.constant 0 : i32
    return %arg0, %c0_i32 : i32, i32
  }
}

</mosaic_0001>

<llo_original>
// kernel: tpu_custom_call.1
$region0: #{tpu_custom_call.1}
  #allocation0 [shape = 'u32[]', space=smem, size = 0x4, offset = 0x4, fixed_abs, tag = 'smem constant byte address 0x4 - core index']
  #allocation1 [shape = 'u32[144,128]{1,0:T(1,128)}', space=vmem, size = 0x12000, scoped, tag = 'internal scratch']
  #allocation2 [shape = 'f32[128,128]{1,0:T(8,128)}', space=vmem, size = 0x10000, scoped, tag = 'scratch operand']
  %s0 = inlined_call_operand.hbm [shape: f32[128,128], index: 0, kind: input, shape index: {}]
  %s1 = inlined_call_operand.hbm [shape: f32[128,128], index: 1, kind: input, shape index: {}]
  %s2 = inlined_call_operand.hbm [shape: f32[128,128], index: 2, kind: output, shape index: {}]
  %s3 = sld [smem:[#allocation0]]
  $region34: #{tpu_custom_call.1} parent=0
    _
  %s5 = ssub.s32 1, %s3
  %s6 = scalar_select 0, %s5, %s3
  $region1: #{tpu_custom_call.1} parent=0
    #allocation3 [shape = 'u8[65536]{0}', space=vmem, size = 0x10000, scoped, tag = 'input window, operand 0, single buffered']
    #allocation4 [shape = 's32[1]{0}', space=sflag, size = 0x4, scoped, tag = 'scoped memory for tpu_custom_call.1']
    #allocation5 [shape = 's32[1]{0}', space=sflag, size = 0x4, scoped, tag = 'scoped memory for tpu_custom_call.1']
    #allocation6 [shape = 'u8[65536]{0}', space=vmem, size = 0x10000, scoped, tag = 'input window, operand 1, single buffered']
    #allocation7 [shape = 's32[1]{0}', space=sflag, size = 0x4, scoped, tag = 'scoped memory for tpu_custom_call.1']
    #allocation8 [shape = 'u8[65536]{0}', space=vmem, size = 0x10000, scoped, tag = 'output window, operand 0, single buffered']
    %7 = vsyncpa [#allocation4], 0
    %8 = vsyncpa [#allocation7], 0
    %9 = vsyncpa [#allocation5], 0
    // Predicated region
    $region2: #{tpu_custom_call.1} parent=1 // pred_check
      _
    $region3: #{tpu_custom_call.1} parent=1 // pred_check_branch
      %11 = sbr.rel (0) target = $region5
    $region4: #{tpu_custom_call.1} parent=1 // pred_region
      %s13 = ssub.s32 2048, 2048
      %14 = vsyncadd [#allocation4], %s13
      %s15 = sshll.u32 [#allocation3], 4
      %s16 = int_to_ptr.vmem [resolvable:$true] %s15
      %21 = dma.hbm_to_vmem [thread:$0]  %s0, 2048, %s16, [#allocation4], 128, 128, 8
    $region5: #{tpu_custom_call.1} parent=1 // pred_fallthru
      _
    // Predicated region
    $region6: #{tpu_custom_call.1} parent=1 // pred_check
      _
    $region7: #{tpu_custom_call.1} parent=1 // pred_check_branch
      %23 = sbr.rel (0) target = $region9
    $region8: #{tpu_custom_call.1} parent=1 // pred_region
      %s25 = ssub.s32 2048, 2048
      %26 = vsyncadd [#allocation7], %s25
      %s27 = sshll.u32 [#allocation6], 4
      %s28 = int_to_ptr.vmem [resolvable:$true] %s27
      %33 = dma.hbm_to_vmem [thread:$0]  %s1, 2048, %s28, [#allocation7], 128, 128, 8
    $region9: #{tpu_custom_call.1} parent=1 // pred_fallthru
      _
    // Predicated region
    $region10: #{tpu_custom_call.1} parent=1 // pred_check
      _
    $region11: #{tpu_custom_call.1} parent=1 // pred_check_branch
      %35 = sbr.rel (0) target = $region13
    $region12: #{tpu_custom_call.1} parent=1 // pred_region
      %36 = dma.done [#allocation4], 2048
    $region13: #{tpu_custom_call.1} parent=1 // pred_fallthru
      _
    // Predicated region
    $region14: #{tpu_custom_call.1} parent=1 // pred_check
      _
    $region15: #{tpu_custom_call.1} parent=1 // pred_check_branch
      %38 = sbr.rel (0) target = $region17
    $region16: #{tpu_custom_call.1} parent=1 // pred_region
      %39 = dma.done [#allocation7], 2048
    $region17: #{tpu_custom_call.1} parent=1 // pred_fallthru
      _
    %p40 = scmp.eq.s32.totalorder 0, 0
    // Predicated region
    $region18: #{tpu_custom_call.1} parent=1 // pred_check
      %p41 = pneg %p40
    $region19: #{tpu_custom_call.1} parent=1 // pred_check_branch
      %43 = sbr.rel (%p41) target = $region21
    $region20: #{tpu_custom_call.1} parent=1 // pred_region
      %44 = vst [vmem:[#allocation2] sm:$0xff] 0.0
      %45 = vst [vmem:[#allocation2 + $0x8] sm:$0xff] 0.0
      %46 = vst [vmem:[#allocation2 + $0x10] sm:$0xff] 0.0
      %47 = vst [vmem:[#allocation2 + $0x18] sm:$0xff] 0.0
      %48 = vst [vmem:[#allocation2 + $0x20] sm:$0xff] 0.0
      %49 = vst [vmem:[#allocation2 + $0x28] sm:$0xff] 0.0
      %50 = vst [vmem:[#allocation2 + $0x30] sm:$0xff] 0.0
      %51 = vst [vmem:[#allocation2 + $0x38] sm:$0xff] 0.0
      %52 = vst [vmem:[#allocation2 + $0x40] sm:$0xff] 0.0
      %53 = vst [vmem:[#allocation2 + $0x48] sm:$0xff] 0.0
      %54 = vst [vmem:[#allocation2 + $0x50] sm:$0xff] 0.0
      %55 = vst [vmem:[#allocation2 + $0x58] sm:$0xff] 0.0
      %56 = vst [vmem:[#allocation2 + $0x60] sm:$0xff] 0.0
      %57 = vst [vmem:[#allocation2 + $0x68] sm:$0xff] 0.0
      %58 = vst [vmem:[#allocation2 + $0x70] sm:$0xff] 0.0
      %59 = vst [vmem:[#allocation2 + $0x78] sm:$0xff] 0.0
    $region21: #{tpu_custom_call.1} parent=1 // pred_fallthru
      _
    %v60 = vld [vmem:[#allocation2] sm:$0xff]
    %v61 = vld [vmem:[#allocation2 + $0x8] sm:$0xff]
    %v62 = vld [vmem:[#allocation2 + $0x10] sm:$0xff]
    %v63 = vld [vmem:[#allocation2 + $0x18] sm:$0xff]
    %v64 = vld [vmem:[#allocation2 + $0x20] sm:$0xff]
    %v65 = vld [vmem:[#allocation2 + $0x28] sm:$0xff]
    %v66 = vld [vmem:[#allocation2 + $0x30] sm:$0xff]
    %v67 = vld [vmem:[#allocation2 + $0x38] sm:$0xff]
    %v68 = vld [vmem:[#allocation2 + $0x40] sm:$0xff]
    %v69 = vld [vmem:[#allocation2 + $0x48] sm:$0xff]
    %v70 = vld [vmem:[#allocation2 + $0x50] sm:$0xff]
    %v71 = vld [vmem:[#allocation2 + $0x58] sm:$0xff]
    %v72 = vld [vmem:[#allocation2 + $0x60] sm:$0xff]
    %v73 = vld [vmem:[#allocation2 + $0x68] sm:$0xff]
    %v74 = vld [vmem:[#allocation2 + $0x70] sm:$0xff]
    %v75 = vld [vmem:[#allocation2 + $0x78] sm:$0xff]
    %v76 = vld [vmem:[#allocation3] sm:$0xff]
    %v77 = vld [vmem:[#allocation3 + $0x8] sm:$0xff]
    %v78 = vld [vmem:[#allocation3 + $0x10] sm:$0xff]
    %v79 = vld [vmem:[#allocation3 + $0x18] sm:$0xff]
    %v80 = vld [vmem:[#allocation3 + $0x20] sm:$0xff]
    %v81 = vld [vmem:[#allocation3 + $0x28] sm:$0xff]
    %v82 = vld [vmem:[#allocation3 + $0x30] sm:$0xff]
    %v83 = vld [vmem:[#allocation3 + $0x38] sm:$0xff]
    %v84 = vld [vmem:[#allocation3 + $0x40] sm:$0xff]
    %v85 = vld [vmem:[#allocation3 + $0x48] sm:$0xff]
    %v86 = vld [vmem:[#allocation3 + $0x50] sm:$0xff]
    %v87 = vld [vmem:[#allocation3 + $0x58] sm:$0xff]
    %v88 = vld [vmem:[#allocation3 + $0x60] sm:$0xff]
    %v89 = vld [vmem:[#allocation3 + $0x68] sm:$0xff]
    %v90 = vld [vmem:[#allocation3 + $0x70] sm:$0xff]
    %v91 = vld [vmem:[#allocation3 + $0x78] sm:$0xff]
    %v92 = vld [vmem:[#allocation6] sm:$0xff]
    %v93 = vld [vmem:[#allocation6 + $0x8] sm:$0xff]
    %v94 = vld [vmem:[#allocation6 + $0x10] sm:$0xff]
    %v95 = vld [vmem:[#allocation6 + $0x18] sm:$0xff]
    %v96 = vld [vmem:[#allocation6 + $0x20] sm:$0xff]
    %v97 = vld [vmem:[#allocation6 + $0x28] sm:$0xff]
    %v98 = vld [vmem:[#allocation6 + $0x30] sm:$0xff]
    %v99 = vld [vmem:[#allocation6 + $0x38] sm:$0xff]
    %v100 = vld [vmem:[#allocation6 + $0x40] sm:$0xff]
    %v101 = vld [vmem:[#allocation6 + $0x48] sm:$0xff]
    %v102 = vld [vmem:[#allocation6 + $0x50] sm:$0xff]
    %v103 = vld [vmem:[#allocation6 + $0x58] sm:$0xff]
    %v104 = vld [vmem:[#allocation6 + $0x60] sm:$0xff]
    %v105 = vld [vmem:[#allocation6 + $0x68] sm:$0xff]
    %v106 = vld [vmem:[#allocation6 + $0x70] sm:$0xff]
    %v107 = vld [vmem:[#allocation6 + $0x78] sm:$0xff]
    %108 = vmatprep.subr.mxu0 0.0
    %109 = vmatpush1.msra.mxu0 %v92
    %110 = vmatprep.subr.mxu0 0.0
    %111 = vmatpush1.msra.mxu0 %v93
    %112 = vmatprep.subr.mxu0 0.0
    %113 = vmatpush1.msra.mxu0 %v94
    %114 = vmatprep.subr.mxu0 0.0
    %115 = vmatpush1.msra.mxu0 %v95
    %116 = vmatprep.subr.mxu0 0.0
    %117 = vmatpush1.msra.mxu0 %v96
    %118 = vmatprep.subr.mxu0 0.0
    %119 = vmatpush1.msra.mxu0 %v97
    %120 = vmatprep.subr.mxu0 0.0
    %121 = vmatpush1.msra.mxu0 %v98
    %122 = vmatprep.subr.mxu0 0.0
    %123 = vmatpush1.msra.mxu0 %v99
    %124 = vmatprep.subr.mxu0 0.0
    %125 = vmatpush1.msra.mxu0 %v100
    %126 = vmatprep.subr.mxu0 0.0
    %127 = vmatpush1.msra.mxu0 %v101
    %128 = vmatprep.subr.mxu0 0.0
    %129 = vmatpush1.msra.mxu0 %v102
    %130 = vmatprep.subr.mxu0 0.0
    %131 = vmatpush1.msra.mxu0 %v103
    %132 = vmatprep.subr.mxu0 0.0
    %133 = vmatpush1.msra.mxu0 %v104
    %134 = vmatprep.subr.mxu0 0.0
    %135 = vmatpush1.msra.mxu0 %v105
    %136 = vmatprep.subr.mxu0 0.0
    %137 = vmatpush1.msra.mxu0 %v106
    %138 = vmatprep.subr.mxu0 0.0
    %139 = vmatpush1.msra.mxu0 %v107
    %140 = vmatprep.subr.mxu0 0.0
    %141 = vmatpush1.msra.mxu0 0.0
    %142 = vmatprep.subr.mxu0 0.0
    %143 = vmatpush1.msra.mxu0 0.0
    %144 = vmatprep.subr.mxu0 0.0
    %145 = vmatpush1.msra.mxu0 0.0
    %146 = vmatprep.subr.mxu0 0.0
    %147 = vmatpush1.msra.mxu0 0.0
    %148 = vmatprep.subr.mxu0 0.0
    %149 = vmatpush1.msra.mxu0 0.0
    %150 = vmatprep.subr.mxu0 0.0
    %151 = vmatpush1.msra.mxu0 0.0
    %152 = vmatprep.subr.mxu0 0.0
    %153 = vmatpush1.msra.mxu0 0.0
    %154 = vmatprep.subr.mxu0 0.0
    %155 = vmatpush1.msra.mxu0 0.0
    %156 = vmatprep.subr.mxu0 0.0
    %157 = vmatpush1.msra.mxu0 0.0
    %158 = vmatprep.subr.mxu0 0.0
    %159 = vmatpush1.msra.mxu0 0.0
    %160 = vmatprep.subr.mxu0 0.0
    %161 = vmatpush1.msra.mxu0 0.0
    %162 = vmatprep.subr.mxu0 0.0
    %163 = vmatpush1.msra.mxu0 0.0
    %164 = vmatprep.subr.mxu0 0.0
    %165 = vmatpush1.msra.mxu0 0.0
    %166 = vmatprep.subr.mxu0 0.0
    %167 = vmatpush1.msra.mxu0 0.0
    %168 = vmatprep.subr.mxu0 0.0
    %169 = vmatpush1.msra.mxu0 0.0
    %170 = vmatprep.subr.mxu0 0.0
    %171 = vmatpush1.msra.mxu0 0.0
    %172 = vmatprep.mubr.f32.mxu0 0.0
    %173 = vmatmul.mubr.f32.gmra.mrb[0].mxu0 %v76
    %v174 = vpop.f32.mrb[0].mxu0
    %v175 = vadd.f32 0.0, %v174
    %v176 = vpop.f32.mrb[0].mxu0
    %177 = vmatprep.mubr.f32.mxu0 0.0
    %178 = vmatmul.mubr.f32.gmra.mrb[0].mxu0 %v77
    %v179 = vpop.f32.mrb[0].mxu0
    %v180 = vadd.f32 0.0, %v179
    %v181 = vpop.f32.mrb[0].mxu0
    %182 = vmatprep.mubr.f32.mxu0 0.0
    %183 = vmatmul.mubr.f32.gmra.mrb[0].mxu0 %v78
    %v184 = vpop.f32.mrb[0].mxu0
    %v185 = vadd.f32 0.0, %v184
    %v186 = vpop.f32.mrb[0].mxu0
    %187 = vmatprep.mubr.f32.mxu0 0.0
    %188 = vmatmul.mubr.f32.gmra.mrb[0].mxu0 %v79
    %v189 = vpop.f32.mrb[0].mxu0
    %v190 = vadd.f32 0.0, %v189
    %v191 = vpop.f32.mrb[0].mxu0
    %192 = vmatprep.mubr.f32.mxu0 0.0
    %193 = vmatmul.mubr.f32.gmra.mrb[0].mxu0 %v80
    %v194 = vpop.f32.mrb[0].mxu0
    %v195 = vadd.f32 0.0, %v194
    %v196 = vpop.f32.mrb[0].mxu0
    %197 = vmatprep.mubr.f32.mxu0 0.0
    %198 = vmatmul.mubr.f32.gmra.mrb[0].mxu0 %v81
    %v199 = vpop.f32.mrb[0].mxu0
    %v200 = vadd.f32 0.0, %v199
    %v201 = vpop.f32.mrb[0].mxu0
    %202 = vmatprep.mubr.f32.mxu0 0.0
    %203 = vmatmul.mubr.f32.gmra.mrb[0].mxu0 %v82
    %v204 = vpop.f32.mrb[0].mxu0
    %v205 = vadd.f32 0.0, %v204
    %v206 = vpop.f32.mrb[0].mxu0
    %207 = vmatprep.mubr.f32.mxu0 0.0
    %208 = vmatmul.mubr.f32.gmra.mrb[0].mxu0 %v83
    %v209 = vpop.f32.mrb[0].mxu0
    %v210 = vadd.f32 0.0, %v209
    %v211 = vpop.f32.mrb[0].mxu0
    %212 = vmatprep.mubr.f32.mxu0 0.0
    %213 = vmatmul.mubr.f32.gmra.mrb[0].mxu0 %v84
    %v214 = vpop.f32.mrb[0].mxu0
    %v215 = vadd.f32 0.0, %v214
    %v216 = vpop.f32.mrb[0].mxu0
    %217 = vmatprep.mubr.f32.mxu0 0.0
    %218 = vmatmul.mubr.f32.gmra.mrb[0].mxu0 %v85
    %v219 = vpop.f32.mrb[0].mxu0
    %v220 = vadd.f32 0.0, %v219
    %v221 = vpop.f32.mrb[0].mxu0
    %222 = vmatprep.mubr.f32.mxu0 0.0
    %223 = vmatmul.mubr.f32.gmra.mrb[0].mxu0 %v86
    %v224 = vpop.f32.mrb[0].mxu0
    %v225 = vadd.f32 0.0, %v224
    %v226 = vpop.f32.mrb[0].mxu0
    %227 = vmatprep.mubr.f32.mxu0 0.0
    %228 = vmatmul.mubr.f32.gmra.mrb[0].mxu0 %v87
    %v229 = vpop.f32.mrb[0].mxu0
    %v230 = vadd.f32 0.0, %v229
    %v231 = vpop.f32.mrb[0].mxu0
    %232 = vmatprep.mubr.f32.mxu0 0.0
    %233 = vmatmul.mubr.f32.gmra.mrb[0].mxu0 %v88
    %v234 = vpop.f32.mrb[0].mxu0
    %v235 = vadd.f32 0.0, %v234
    %v236 = vpop.f32.mrb[0].mxu0
    %237 = vmatprep.mubr.f32.mxu0 0.0
    %238 = vmatmul.mubr.f32.gmra.mrb[0].mxu0 %v89
    %v239 = vpop.f32.mrb[0].mxu0
    %v240 = vadd.f32 0.0, %v239
    %v241 = vpop.f32.mrb[0].mxu0
    %242 = vmatprep.mubr.f32.mxu0 0.0
    %243 = vmatmul.mubr.f32.gmra.mrb[0].mxu0 %v90
    %v244 = vpop.f32.mrb[0].mxu0
    %v245 = vadd.f32 0.0, %v244
    %v246 = vpop.f32.mrb[0].mxu0
    %247 = vmatprep.mubr.f32.mxu0 0.0
    %248 = vmatmul.mubr.f32.gmra.mrb[0].mxu0 %v91
    %v249 = vpop.f32.mrb[0].mxu0
    %v250 = vadd.f32 0.0, %v249
    %v251 = vpop.f32.mrb[0].mxu0
    %252 = vdwg.mxu0
    %v253 = vadd.f32 %v60, %v175
    %v254 = vadd.f32 %v61, %v180
    %v255 = vadd.f32 %v62, %v185
    %v256 = vadd.f32 %v63, %v190
    %v257 = vadd.f32 %v64, %v195
    %v258 = vadd.f32 %v65, %v200
    %v259 = vadd.f32 %v66, %v205
    %v260 = vadd.f32 %v67, %v210
    %v261 = vadd.f32 %v68, %v215
    %v262 = vadd.f32 %v69, %v220
    %v263 = vadd.f32 %v70, %v225
    %v264 = vadd.f32 %v71, %v230
    %v265 = vadd.f32 %v72, %v235
    %v266 = vadd.f32 %v73, %v240
    %v267 = vadd.f32 %v74, %v245
    %v268 = vadd.f32 %v75, %v250
    %269 = vst [vmem:[#allocation2] sm:$0xff] %v253
    %270 = vst [vmem:[#allocation2 + $0x8] sm:$0xff] %v254
    %271 = vst [vmem:[#allocation2 + $0x10] sm:$0xff] %v255
    %272 = vst [vmem:[#allocation2 + $0x18] sm:$0xff] %v256
    %273 = vst [vmem:[#allocation2 + $0x20] sm:$0xff] %v257
    %274 = vst [vmem:[#allocation2 + $0x28] sm:$0xff] %v258
    %275 = vst [vmem:[#allocation2 + $0x30] sm:$0xff] %v259
    %276 = vst [vmem:[#allocation2 + $0x38] sm:$0xff] %v260
    %277 = vst [vmem:[#allocation2 + $0x40] sm:$0xff] %v261
    %278 = vst [vmem:[#allocation2 + $0x48] sm:$0xff] %v262
    %279 = vst [vmem:[#allocation2 + $0x50] sm:$0xff] %v263
    %280 = vst [vmem:[#allocation2 + $0x58] sm:$0xff] %v264
    %281 = vst [vmem:[#allocation2 + $0x60] sm:$0xff] %v265
    %282 = vst [vmem:[#allocation2 + $0x68] sm:$0xff] %v266
    %283 = vst [vmem:[#allocation2 + $0x70] sm:$0xff] %v267
    %284 = vst [vmem:[#allocation2 + $0x78] sm:$0xff] %v268
    // Predicated region
    $region22: #{tpu_custom_call.1} parent=1 // pred_check
      %p285 = pneg %p40
    $region23: #{tpu_custom_call.1} parent=1 // pred_check_branch
      %287 = sbr.rel (%p285) target = $region25
    $region24: #{tpu_custom_call.1} parent=1 // pred_region
      %v288 = vld [vmem:[#allocation2] sm:$0xff]
      %v289 = vld [vmem:[#allocation2 + $0x8] sm:$0xff]
      %v290 = vld [vmem:[#allocation2 + $0x10] sm:$0xff]
      %v291 = vld [vmem:[#allocation2 + $0x18] sm:$0xff]
      %v292 = vld [vmem:[#allocation2 + $0x20] sm:$0xff]
      %v293 = vld [vmem:[#allocation2 + $0x28] sm:$0xff]
      %v294 = vld [vmem:[#allocation2 + $0x30] sm:$0xff]
      %v295 = vld [vmem:[#allocation2 + $0x38] sm:$0xff]
      %v296 = vld [vmem:[#allocation2 + $0x40] sm:$0xff]
      %v297 = vld [vmem:[#allocation2 + $0x48] sm:$0xff]
      %v298 = vld [vmem:[#allocation2 + $0x50] sm:$0xff]
      %v299 = vld [vmem:[#allocation2 + $0x58] sm:$0xff]
      %v300 = vld [vmem:[#allocation2 + $0x60] sm:$0xff]
      %v301 = vld [vmem:[#allocation2 + $0x68] sm:$0xff]
      %v302 = vld [vmem:[#allocation2 + $0x70] sm:$0xff]
      %v303 = vld [vmem:[#allocation2 + $0x78] sm:$0xff]
      %304 = vst [vmem:[#allocation8] sm:$0xff] %v288
      %305 = vst [vmem:[#allocation8 + $0x8] sm:$0xff] %v289
      %306 = vst [vmem:[#allocation8 + $0x10] sm:$0xff] %v290
      %307 = vst [vmem:[#allocation8 + $0x18] sm:$0xff] %v291
      %308 = vst [vmem:[#allocation8 + $0x20] sm:$0xff] %v292
      %309 = vst [vmem:[#allocation8 + $0x28] sm:$0xff] %v293
      %310 = vst [vmem:[#allocation8 + $0x30] sm:$0xff] %v294
      %311 = vst [vmem:[#allocation8 + $0x38] sm:$0xff] %v295
      %312 = vst [vmem:[#allocation8 + $0x40] sm:$0xff] %v296
      %313 = vst [vmem:[#allocation8 + $0x48] sm:$0xff] %v297
      %314 = vst [vmem:[#allocation8 + $0x50] sm:$0xff] %v298
      %315 = vst [vmem:[#allocation8 + $0x58] sm:$0xff] %v299
      %316 = vst [vmem:[#allocation8 + $0x60] sm:$0xff] %v300
      %317 = vst [vmem:[#allocation8 + $0x68] sm:$0xff] %v301
      %318 = vst [vmem:[#allocation8 + $0x70] sm:$0xff] %v302
      %319 = vst [vmem:[#allocation8 + $0x78] sm:$0xff] %v303
    $region25: #{tpu_custom_call.1} parent=1 // pred_fallthru
      _
    // Predicated region
    $region26: #{tpu_custom_call.1} parent=1 // pred_check
      _
    $region27: #{tpu_custom_call.1} parent=1 // pred_check_branch
      %321 = sbr.rel (0) target = $region29
    $region28: #{tpu_custom_call.1} parent=1 // pred_region
      %s323 = ssub.s32 2048, 2048
      %324 = vsyncadd [#allocation5], %s323
      %s325 = sshll.u32 [#allocation8], 4
      %s326 = int_to_ptr.vmem [resolvable:$true] %s325
      %331 = dma.vmem_to_hbm [thread:$0]  %s326, 2048, %s2, [#allocation5], 128, 128, 8
    $region29: #{tpu_custom_call.1} parent=1 // pred_fallthru
      _
    // Predicated region
    $region30: #{tpu_custom_call.1} parent=1 // pred_check
      _
    $region31: #{tpu_custom_call.1} parent=1 // pred_check_branch
      %333 = sbr.rel (0) target = $region33
    $region32: #{tpu_custom_call.1} parent=1 // pred_region
      %334 = dma.done [#allocation5], 2048
    $region33: #{tpu_custom_call.1} parent=1 // pred_fallthru
      _
    %335 = vsyncpa [#allocation4], 1
    %336 = vsyncpa [#allocation7], 1
    %337 = vsyncpa [#allocation5], 1

</llo_original>
